<compile_context>
chip_gen: v5e
topology: v5e:2x2
jax: 0.10.0
libtpu: 0.0.40
codegen_flags: <defaults>
</compile_context>

<pallas_src>
import functools

import jax
import jax.numpy as jnp
from jax.experimental import pallas as pl
from jax.experimental.pallas import tpu as pltpu


def _round_up(x, m):
    return (x + m - 1) // m * m


def _log_probs(x, applied_softmax):
    """log-probabilities along the class (lane) axis, computed in float32."""
    x = x.astype(jnp.float32)
    if applied_softmax:
        # inputs are probabilities (post-softmax); matches torch.log(inputs),
        # including -inf for exactly-zero probabilities.
        return jnp.log(x)
    # inputs are logits: numerically stable log-softmax along classes.
    m = jnp.max(x, axis=-1, keepdims=True)
    lse = jnp.log(jnp.sum(jnp.exp(x - m), axis=-1, keepdims=True)) + m
    return x - lse


def _ce_ls_labels_kernel(x_ref, lbl_ref, loss_ref, *,
                         applied_softmax, epsilon, num_classes):
    """One (TB, K) row tile; targets arrive as (TB, 1) int32 class labels."""
    log_p = _log_probs(x_ref[...], applied_softmax)              # (TB, K) f32
    tb, k = log_p.shape
    cols = jax.lax.broadcasted_iota(jnp.int32, (tb, k), 1)       # class index
    lbl = lbl_ref[...]                                           # (TB, 1) i32
    # loss = -(1-eps) * log_p[label] - (eps/K) * sum(log_p)
    picked = jnp.sum(jnp.where(cols == lbl, log_p, 0.0), axis=-1, keepdims=True)
    total = jnp.sum(log_p, axis=-1, keepdims=True)
    row_loss = -((1.0 - epsilon) * picked + (epsilon / num_classes) * total)
    loss_ref[...] = row_loss.astype(loss_ref.dtype)


def _ce_ls_dense_kernel(x_ref, t_ref, loss_ref, *,
                        applied_softmax, epsilon, num_classes):
    """One (TB, K) row tile with dense (TB, K) soft targets."""
    log_p = _log_probs(x_ref[...], applied_softmax)
    t = t_ref[...].astype(jnp.float32)
    t_smooth = (1.0 - epsilon) * t + epsilon / num_classes
    row_loss = -jnp.sum(t_smooth * log_p, axis=-1, keepdims=True)
    loss_ref[...] = row_loss.astype(loss_ref.dtype)


def _pick_block_rows(batch, num_classes, max_tile_elems=1 << 20):
    """Largest multiple-of-8 row tile whose f32 working set stays ~4 MiB."""
    rows = max(8, (max_tile_elems // max(num_classes, 1)) // 8 * 8)
    rows = min(rows, _round_up(batch, 8))
    if batch % rows != 0 and batch % 8 == 0:
        # prefer an exact divisor of the batch (no padding) when one exists
        r = rows
        while r >= 8:
            if batch % r == 0:
                return r
            r -= 8
    return rows


def cross_entropy_label_smooth(inputs, targets, *, num_classes, epsilon=0.1,
                               reduction=True, applied_softmax=True,
                               block_rows=None):
    """JAX/Pallas equivalent of CrossEntropyLabelSmooth.forward.

    inputs : (B, K) float array (probabilities if applied_softmax else logits)
    targets: (B,) integer labels, or (B, K) dense targets
    """
    B, K = inputs.shape
    assert K == num_classes
    dense = (targets.shape == inputs.shape)

    if block_rows is None:
        block_rows = _pick_block_rows(B, K)
    b_pad = _round_up(B, block_rows)

    if b_pad != B:
        pad = b_pad - B
        # pad probabilities with 1.0 so log() of pad rows is finite (they are
        # sliced off before the mean anyway).
        pad_val = 1.0 if applied_softmax else 0.0
        inputs = jnp.pad(inputs, ((0, pad), (0, 0)), constant_values=pad_val)
        targets = (jnp.pad(targets, ((0, pad), (0, 0))) if dense
                   else jnp.pad(targets, ((0, pad),)))

    if dense:
        t_arg = targets                       # keep caller dtype; cast in-kernel
        t_spec = pl.BlockSpec((block_rows, K), lambda i: (i, 0))
        kernel = functools.partial(_ce_ls_dense_kernel,
                                   applied_softmax=applied_softmax,
                                   epsilon=float(epsilon),
                                   num_classes=int(num_classes))
        t_row_bytes = K * targets.dtype.itemsize
    else:
        t_arg = targets.astype(jnp.int32).reshape(b_pad, 1)
        t_spec = pl.BlockSpec((block_rows, 1), lambda i: (i, 0))
        kernel = functools.partial(_ce_ls_labels_kernel,
                                   applied_softmax=applied_softmax,
                                   epsilon=float(epsilon),
                                   num_classes=int(num_classes))
        t_row_bytes = 4

    # VMEM budget: double-buffered operands + a few f32 (TB, K) temporaries.
    # Cap at 64 MiB so the request never exceeds v7x's physical per-TC VMEM
    # (it still lifts v5e's 16 MiB / v6e's 32 MiB scoped defaults when needed).
    tile_f32 = block_rows * K * 4
    tile_io = block_rows * (K * inputs.dtype.itemsize + t_row_bytes)
    vmem_limit = int(min(max(32 << 20, 2 * tile_io + 5 * tile_f32 + (2 << 20)),
                         64 << 20))

    losses = pl.pallas_call(
        kernel,
        out_shape=jax.ShapeDtypeStruct((b_pad, 1), jnp.float32),
        grid_spec=pltpu.PrefetchScalarGridSpec(
            num_scalar_prefetch=0,
            grid=(b_pad // block_rows,),
            in_specs=[
                pl.BlockSpec((block_rows, K), lambda i: (i, 0)),
                t_spec,
            ],
            out_specs=pl.BlockSpec((block_rows, 1), lambda i: (i, 0)),
        ),
        compiler_params=pltpu.CompilerParams(
            # no carried accumulator -> row tiles can shard across both
            # TensorCores on v7x; neutral on v5e/v6e.
            dimension_semantics=("parallel",),
            vmem_limit_bytes=vmem_limit,
        ),
    )(inputs, t_arg)

    losses = losses[:B, 0]
    return jnp.mean(losses) if reduction else losses


def _reference(inputs, targets, *, num_classes, epsilon=0.1, reduction=True,
               applied_softmax=True):
    """Pure-JAX reference mirroring the PyTorch module."""
    if applied_softmax:
        log_probs = jnp.log(inputs)
    else:
        log_probs = jax.nn.log_softmax(inputs, axis=-1)
    if targets.shape != inputs.shape:
        targets = jax.nn.one_hot(targets, num_classes, dtype=jnp.float32)
    targets = (1.0 - epsilon) * targets + epsilon / num_classes
    loss = jnp.sum(-targets * log_probs, axis=1)
    return jnp.mean(loss) if reduction else loss


if __name__ == "__main__":
    key = jax.random.PRNGKey(0)
    B, K = 8, 16  # batch, num_classes
    k1, k2, k3, k4 = jax.random.split(key, 4)

    logits = jax.random.normal(k1, (B, K), dtype=jnp.float32)
    probs = jax.nn.softmax(logits, axis=-1)            # "after softmax" inputs
    labels = jax.random.randint(k2, (B,), 0, K)        # integer targets

    # default module config: epsilon=0.1, reduction=True, applied_softmax=True
    out = cross_entropy_label_smooth(
        probs, labels, num_classes=K, epsilon=0.1,
        reduction=True, applied_softmax=True)
    out = jax.block_until_ready(out)
    ref = _reference(probs, labels, num_classes=K, epsilon=0.1,
                     reduction=True, applied_softmax=True)
    assert jnp.allclose(out, ref, atol=1e-5, rtol=1e-5), (out, ref)

    # no-reduction + logits (log-softmax) path
    out_vec = cross_entropy_label_smooth(
        logits, labels, num_classes=K, epsilon=0.1,
        reduction=False, applied_softmax=False)
    out_vec = jax.block_until_ready(out_vec)
    ref_vec = _reference(logits, labels, num_classes=K, epsilon=0.1,
                         reduction=False, applied_softmax=False)
    assert jnp.allclose(out_vec, ref_vec, atol=1e-5, rtol=1e-5)

    # dense-targets path + ragged batch (exercises the padding branch)
    B2 = 6
    logits2 = jax.random.normal(k3, (B2, K), dtype=jnp.float32)
    probs2 = jax.nn.softmax(logits2, axis=-1)
    labels2 = jax.random.randint(k4, (B2,), 0, K)
    dense_targets2 = jax.nn.one_hot(labels2, K, dtype=jnp.float32)
    out2 = cross_entropy_label_smooth(
        probs2, dense_targets2, num_classes=K, epsilon=0.1,
        reduction=True, applied_softmax=True)
    out2 = jax.block_until_ready(out2)
    ref2 = _reference(probs2, labels2, num_classes=K, epsilon=0.1,
                      reduction=True, applied_softmax=True)
    assert jnp.allclose(out2, ref2, atol=1e-5, rtol=1e-5), (out2, ref2)

    print("KERNEL_OK")
</pallas_src>

<mosaic_0001>
module attributes {stable_mosaic.version = 11 : i64} {
  func.func @_ce_ls_labels_kernel(%arg0: i32, %arg1: memref<8x16xf32, #tpu.memory_space<vmem>>, %arg2: memref<8x1xi32, #tpu.memory_space<vmem>>, %arg3: memref<8x1xf32, #tpu.memory_space<vmem>>) attributes {dimension_semantics = [#tpu.dimension_semantics<parallel>], iteration_bounds = array<i64: 1>, scalar_prefetch = 0 : i64, scratch_operands = 0 : i64, tpu.core_type = #tpu.core_type<tc>, window_params = [{transform_indices = @transform_0, window_bounds = array<i64: 8, 16>}, {transform_indices = @transform_1, window_bounds = array<i64: 8, 1>}, {transform_indices = @transform_2, window_bounds = array<i64: 8, 1>}]} {
    %c0 = arith.constant 0 : index
    %c0_0 = arith.constant 0 : index
    %0 = vector.load %arg1[%c0, %c0_0] : memref<8x16xf32, #tpu.memory_space<vmem>>, vector<8x16xf32>
    %1 = math.log %0 : vector<8x16xf32>
    %2 = tpu.iota {dimensions = array<i32: 1>} : vector<8x16xi32>
    %c0_1 = arith.constant 0 : index
    %c0_2 = arith.constant 0 : index
    %3 = vector.load %arg2[%c0_1, %c0_2] : memref<8x1xi32, #tpu.memory_space<vmem>>, vector<8x1xi32>
    %4 = vector.broadcast %3 : vector<8x1xi32> to vector<8x16xi32>
    %5 = arith.cmpi eq, %2, %4 : vector<8x16xi32>
    %cst = arith.constant 0.000000e+00 : f32
    %6 = vector.broadcast %cst : f32 to vector<8x16xf32>
    %7 = arith.select %5, %1, %6 : vector<8x16xi1>, vector<8x16xf32>
    %cst_3 = arith.constant dense<0.000000e+00> : vector<8xf32>
    %8 = vector.multi_reduction <add>, %7, %cst_3 [1] : vector<8x16xf32> to vector<8xf32>
    %9 = vector.shape_cast %8 : vector<8xf32> to vector<8x1xf32>
    %cst_4 = arith.constant dense<0.000000e+00> : vector<8xf32>
    %10 = vector.multi_reduction <add>, %1, %cst_4 [1] : vector<8x16xf32> to vector<8xf32>
    %11 = vector.shape_cast %10 : vector<8xf32> to vector<8x1xf32>
    %cst_5 = arith.constant 0.899999976 : f32
    %12 = vector.broadcast %cst_5 : f32 to vector<8x1xf32>
    %13 = arith.mulf %12, %9 : vector<8x1xf32>
    %cst_6 = arith.constant 6.250000e-03 : f32
    %14 = vector.broadcast %cst_6 : f32 to vector<8x1xf32>
    %15 = arith.mulf %14, %11 : vector<8x1xf32>
    %16 = arith.addf %13, %15 : vector<8x1xf32>
    %cst_7 = arith.constant 0.000000e+00 : f32
    %17 = vector.broadcast %cst_7 : f32 to vector<8x1xf32>
    %18 = arith.subf %17, %16 : vector<8x1xf32>
    %c0_8 = arith.constant 0 : index
    %c0_9 = arith.constant 0 : index
    %19 = vector.load %arg3[%c0_8, %c0_9] : memref<8x1xf32, #tpu.memory_space<vmem>>, vector<8x1xf32>
    tpu.vector_store %arg3[%c0_8, %c0_9], %18 {strides = array<i32>} : memref<8x1xf32, #tpu.memory_space<vmem>>, vector<8x1xf32>,
    return
  }
  func.func @transform_0(%arg0: i32) -> (i32, i32) {
    %c0_i32 = arith.constant 0 : i32
    %c0_i32_0 = arith.constant 0 : i32
    return %arg0, %c0_i32 : i32, i32
  }
  func.func @transform_1(%arg0: i32) -> (i32, i32) {
    %c0_i32 = arith.constant 0 : i32
    %c0_i32_0 = arith.constant 0 : i32
    return %arg0, %c0_i32 : i32, i32
  }
  func.func @transform_2(%arg0: i32) -> (i32, i32) {
    %c0_i32 = arith.constant 0 : i32
    %c0_i32_0 = arith.constant 0 : i32
    return %arg0, %c0_i32 : i32, i32
  }
}

</mosaic_0001>

<llo_original>
// kernel: tpu_custom_call.1
$region0: #{tpu_custom_call.1}
  #allocation0 [shape = 'u32[]', space=smem, size = 0x4, offset = 0x4, fixed_abs, tag = 'smem constant byte address 0x4 - core index']
  #allocation1 [shape = 'u32[72,128]{1,0:T(1,128)}', space=vmem, size = 0x9000, scoped, tag = 'internal scratch']
  %s0 = inlined_call_operand.vmem [shape: f32[8,16], index: 0, kind: input, shape index: {}]
  %s1 = inlined_call_operand.vmem [shape: s32[8,1], index: 1, kind: input, shape index: {}]
  %s2 = inlined_call_operand.vmem [shape: f32[8,1], index: 2, kind: output, shape index: {}]
  %s3 = sld [smem:[#allocation0]]
  $region18: #{tpu_custom_call.1} parent=0
    _
  %s5 = ssub.s32 1, %s3
  %s6 = scalar_select 0, %s5, %s3
  // Predicated region
  $region2: #{tpu_custom_call.1} parent=0 // pred_check
    _
  $region3: #{tpu_custom_call.1} parent=0 // pred_check_branch
    %8 = sbr.rel (0) target = $region5
  $region4: #{tpu_custom_call.1} parent=0 // pred_region
    _
  $region5: #{tpu_custom_call.1} parent=0 // pred_fallthru
    _
  // Predicated region
  $region6: #{tpu_custom_call.1} parent=0 // pred_check
    _
  $region7: #{tpu_custom_call.1} parent=0 // pred_check_branch
    %10 = sbr.rel (0) target = $region9
  $region8: #{tpu_custom_call.1} parent=0 // pred_region
    _
  $region9: #{tpu_custom_call.1} parent=0 // pred_fallthru
    _
  %v11 = vld [vmem:[%s0] sm:$0xff]
  %v12 = vlog2.pop %v11
  %v13 = vmul.f32 %v12, 0.6931472
  %v14 = vlaneseq
  %v15 = vand.u32 %v14, 127
  %v16 = vld [vmem:[%s1] sm:$0xff]
  %17 = vset.pattern.permute.xlu0 0
  %18 = vperm.xlu0 %17, %v16
  %v19 = vpop.permute.xlu0 %18
  %vm20 = vcmp.eq.s32.totalorder %v15, %v19
  %v21 = vsel %vm20, %v13, 0.0
  %vm22 = vcmask 130048
  %v23 = vsel %vm22, %v21, 0.0
  %24 = vadd.xlane.f32.xlu0 %v23
  %v25 = vpop.xlane.xlu0 %24
  %v26 = vsel %vm22, %v13, 0.0
  %27 = vadd.xlane.f32.xlu0 %v26
  %v28 = vpop.xlane.xlu0 %27
  %v29 = vmul.f32 %v25, 0.9
  %v30 = vmul.f32 %v28, 0.00625
  %v31 = vadd.f32 %v29, %v30
  %v32 = vsub.f32 0.0, %v31
  %vm33 = vcmask 7168
  %34 = vst.msk [vmem:[%s2] sm:$0xff] %vm33, %v32
  // Predicated region
  $region10: #{tpu_custom_call.1} parent=0 // pred_check
    _
  $region11: #{tpu_custom_call.1} parent=0 // pred_check_branch
    %36 = sbr.rel (0) target = $region13
  $region12: #{tpu_custom_call.1} parent=0 // pred_region
    _
  $region13: #{tpu_custom_call.1} parent=0 // pred_fallthru
    _
  // Predicated region
  $region14: #{tpu_custom_call.1} parent=0 // pred_check
    _
  $region15: #{tpu_custom_call.1} parent=0 // pred_check_branch
    %38 = sbr.rel (0) target = $region17
  $region16: #{tpu_custom_call.1} parent=0 // pred_region
    _
  $region17: #{tpu_custom_call.1} parent=0 // pred_fallthru
    _

</llo_original>
